<compile_context>
chip_gen: v7x
topology: tpu7x:2x2x1
jax: 0.10.0
libtpu: 0.0.40
codegen_flags: <defaults>
</compile_context>

<pallas_src>
import functools
import math

import jax
import jax.numpy as jnp
import numpy as np
from jax.experimental import pallas as pl
from jax.experimental.pallas import tpu as pltpu


# --------------------------- in-kernel math ---------------------------------
def _mixture_density_derivative(p, *, bulk_modulus_model, air_dissolution_model,
                                rho_L_atm, beta_L_atm, beta_gain, air_fraction,
                                rho_g_atm, polytropic_index, p_atm, p_crit, p_min):
    """Element-wise port of My_loss.mixture_density_derivative (runs inside the kernel).

    All mode strings / physical constants are static Python values baked in at
    trace time; pressure-dependent branches become jnp.where.
    """
    inv_beta = 1.0 / beta_L_atm
    p_used = jnp.maximum(p, p_min)                 # single vmax instead of cmp+select
    dp_atm = p_used - p_atm

    # theta / dtheta_dp (only consumed when air_fraction != 0)
    if air_dissolution_model == 'off':
        theta = 1.0
        dtheta_dp = 0.0
    else:
        L = p_crit - p_atm
        inv_L = 1.0 / L
        x = dp_atm * inv_L
        x2 = x * x
        theta_mid = 1.0 - 3.0 * x2 + 2.0 * x2 * x
        theta = jnp.where(p_used <= p_atm, 1.0,
                          jnp.where(p_used >= p_crit, 0.0, theta_mid))
        dtheta_mid = 6.0 * dp_atm * (p_used - p_crit) * (inv_L * inv_L * inv_L)
        dtheta_dp = jnp.where((p_used <= p_atm) | (p_used >= p_crit), 0.0, dtheta_mid)

    # p_denom / p_ratio
    if air_fraction == 0:
        p_denom = 0.0
        p_ratio = 0.0
    else:
        af = air_fraction / (1.0 - air_fraction)
        inv_n = 1.0 / polytropic_index
        log_p_atm = math.log(p_atm)                # trace-time constant
        # (p_atm / p_used) ** (1/n)  without the divide
        pow_term = jnp.exp(inv_n * (log_p_atm - jnp.log(p_used)))
        p_denom = af * pow_term * theta
        inv_p = pl.reciprocal(p_used, approx=True)  # EUP, frees VALU slots
        if air_dissolution_model == 'off':
            p_ratio = p_denom * inv_p * inv_n
        else:
            term2 = theta * inv_p * inv_n - dtheta_dp
            p_ratio = af * pow_term * term2

    # exp_term
    if air_fraction == 0:
        if bulk_modulus_model == 'const':
            exp_term = jnp.exp(dp_atm * inv_beta) * inv_beta
        else:
            # clamp keeps log() finite if a pathological config drives base <= 0
            base = jnp.maximum(1.0 + beta_gain * dp_atm * inv_beta, 1e-30)
            exp_term = jnp.exp((-1.0 + 1.0 / beta_gain) * jnp.log(base)) * inv_beta
    elif bulk_modulus_model == 'const':
        exp_term = jnp.exp(-dp_atm * inv_beta) * inv_beta
    else:
        base = jnp.maximum(1.0 + beta_gain * dp_atm * inv_beta, 1e-30)
        exp_term = jnp.exp((-1.0 - 1.0 / beta_gain) * jnp.log(base)) * inv_beta

    if air_fraction == 0:
        return rho_L_atm * exp_term

    rho_mix_init = rho_L_atm + rho_g_atm * (air_fraction / (1.0 - air_fraction))
    if bulk_modulus_model == 'const':
        denominator = beta_L_atm * exp_term + p_denom
    else:
        beta_term = 1.0 + beta_gain * dp_atm * inv_beta
        denominator = beta_L_atm * exp_term * beta_term + p_denom
    inv_den = pl.reciprocal(denominator, approx=True)       # EUP
    return rho_mix_init * (exp_term + p_ratio) * inv_den * inv_den


def _my_loss_kernel(P_ref, tP_ref, dpdt_ref, Qr_ref, out_ref, *, V, cfg):
    """One (tile_rows, 128) tile -> one (8, 128) partial-sum block."""
    theta_w = 0.001
    P = P_ref[...]                                   # outputs_P[i] tile
    drho = _mixture_density_derivative(P, **cfg)
    loss_physics = jnp.abs(V * drho * dpdt_ref[...] - Qr_ref[...])
    loss_M = jnp.abs(P - tP_ref[...])
    contrib = loss_M + theta_w * loss_physics        # (tile_rows, 128)

    tile_rows = contrib.shape[0]
    partial = contrib[0:8, :]                        # aligned static slices (VALU adds)
    for r in range(1, tile_rows // 8):
        partial = partial + contrib[8 * r:8 * (r + 1), :]
    out_ref[...] = partial                           # lane/sublane-dense (8,128) store


# ------------------------------ wrapper --------------------------------------
def my_loss_pallas(targets_P, t, rho, V, inputs_Q, outputs_P, *,
                   tile_rows=None, **cfg):
    f32 = jnp.float32
    targets_P = jnp.asarray(targets_P, f32)
    t = jnp.asarray(t, f32)
    inputs_Q = jnp.asarray(inputs_Q, f32)
    outputs_P = jnp.asarray(outputs_P, f32)

    N = targets_P.shape[0]
    assert N >= 2, "need at least two time samples"
    M = N - 1                                          # steps i = 1 .. N-1

    # Wrapper-side shifts + precompute (XLA fuses these into the HBM writes);
    # keeps the kernel free of unaligned lane slices and of the dpdt divide.
    P_i = outputs_P[1:]
    dpdt = (outputs_P[1:] - outputs_P[:-1]) / (t[1:] - t[0])
    tP_i = targets_P[1:]
    Qr = inputs_Q[1:] * jnp.asarray(rho, f32)

    if tile_rows is None:
        tile_rows = 8 if M <= 64 * 128 else 64         # 4 KiB .. 32 KiB per buffer
    assert tile_rows % 8 == 0

    TILE = tile_rows * 128
    num_tiles = -(-M // TILE)
    padded = num_tiles * TILE
    pad = padded - M
    rows = num_tiles * tile_rows

    # Padding chosen so padded elements contribute exactly 0:
    #   P == tP  -> loss_M = 0 ;  dpdt == 0 and Q*rho == 0 -> loss_physics = 0.
    p_pad = float(cfg['p_atm'])                        # benign (finite drho, no NaN)
    P_p = jnp.pad(P_i, (0, pad), constant_values=p_pad).reshape(rows, 128)
    tP_p = jnp.pad(tP_i, (0, pad), constant_values=p_pad).reshape(rows, 128)
    dpdt_p = jnp.pad(dpdt, (0, pad)).reshape(rows, 128)
    Qr_p = jnp.pad(Qr, (0, pad)).reshape(rows, 128)

    kernel = functools.partial(_my_loss_kernel, V=float(V), cfg=dict(cfg))
    in_spec = pl.BlockSpec((tile_rows, 128), lambda i: (i, 0))

    partials = pl.pallas_call(
        kernel,
        out_shape=jax.ShapeDtypeStruct((num_tiles * 8, 128), f32),
        grid=(num_tiles,),
        in_specs=[in_spec, in_spec, in_spec, in_spec],
        out_specs=pl.BlockSpec((8, 128), lambda i: (i, 0)),
        compiler_params=pltpu.CompilerParams(
            dimension_semantics=("parallel",)),       # shards across v7x's 2 cores
    )(P_p, tP_p, dpdt_p, Qr_p)

    return jnp.sum(partials)                           # tiny final reduction in XLA


# ---------------- pure-Python reference (mirrors the PyTorch code) -----------
def _mdd_ref(p, *, bulk_modulus_model, air_dissolution_model, rho_L_atm, beta_L_atm,
             beta_gain, air_fraction, rho_g_atm, polytropic_index, p_atm, p_crit, p_min):
    p_used = p if p >= p_min else p_min
    if air_dissolution_model == 'off':
        theta = 1.0
    elif p_used <= p_atm:
        theta = 1.0
    elif p_used >= p_crit:
        theta = 0.0
    else:
        L = p_crit - p_atm
        x = (p_used - p_atm) / L
        theta = 1 - 3 * x ** 2 + 2 * x ** 3
    if air_dissolution_model == 'off' or p_used <= p_atm or p_used >= p_crit:
        dtheta_dp = 0.0
    else:
        L = p_crit - p_atm
        dtheta_dp = 6 * (p_used - p_atm) * (p_used - p_crit) / L ** 3
    if air_fraction == 0:
        p_denom = 0.0
        p_ratio = 0.0
    else:
        p_denom = air_fraction / (1 - air_fraction) * (p_atm / p_used) ** (1 / polytropic_index) * theta
        if air_dissolution_model == 'off':
            p_ratio = p_denom / (p_used * polytropic_index)
        else:
            term1 = air_fraction / (1 - air_fraction) * (p_atm / p_used) ** (1 / polytropic_index)
            term2 = theta / (p_used * polytropic_index) - dtheta_dp
            p_ratio = term1 * term2
    if air_fraction == 0:
        if bulk_modulus_model == 'const':
            exp_term = math.exp((p_used - p_atm) / beta_L_atm) / beta_L_atm
        else:
            exp_term = (1 + beta_gain * (p_used - p_atm) / beta_L_atm) ** (-1 + 1 / beta_gain) / beta_L_atm
    elif bulk_modulus_model == 'const':
        exp_term = math.exp(-(p_used - p_atm) / beta_L_atm) / beta_L_atm
    else:
        exp_term = (1 + beta_gain * (p_used - p_atm) / beta_L_atm) ** (-1 - 1 / beta_gain) / beta_L_atm
    rho_mix_init = rho_L_atm + rho_g_atm * (air_fraction / (1 - air_fraction))
    if air_fraction == 0:
        return rho_L_atm * exp_term
    if bulk_modulus_model == 'const':
        denominator = beta_L_atm * exp_term + p_denom
    else:
        beta_term = 1 + beta_gain * (p_used - p_atm) / beta_L_atm
        denominator = beta_L_atm * exp_term * beta_term + p_denom
    return rho_mix_init * (exp_term + p_ratio) / denominator ** 2


def my_loss_reference(targets_P, t, rho, V, inputs_Q, outputs_P, **cfg):
    num = len(targets_P)
    theta = 0.001
    loss = 0.0
    for i in range(1, num):
        dpdt = (outputs_P[i] - outputs_P[i - 1]) / (t[i] - t[0])
        lp = abs(V * _mdd_ref(float(outputs_P[i]), **cfg) * dpdt - inputs_Q[i] * rho)
        lm = abs(outputs_P[i] - targets_P[i])
        loss += lm + theta * lp
    return loss


# --------------------------------- test ---------------------------------------
def _check(cfg, N, rho, V, key):
    k1, k2, k3 = jax.random.split(key, 3)
    targets_P = 1.0 + 2.0 * jax.random.uniform(k1, (N,), dtype=jnp.float32)
    outputs_P = 1.0 + 2.0 * jax.random.uniform(k2, (N,), dtype=jnp.float32)
    inputs_Q = 0.01 * jax.random.uniform(k3, (N,), dtype=jnp.float32)
    t = jnp.arange(1, N + 1, dtype=jnp.float32) * 0.1

    loss = my_loss_pallas(targets_P, t, rho, V, inputs_Q, outputs_P, **cfg)
    loss = jax.block_until_ready(loss)

    ref = my_loss_reference(np.asarray(targets_P, np.float64), np.asarray(t, np.float64),
                            rho, V, np.asarray(inputs_Q, np.float64),
                            np.asarray(outputs_P, np.float64), **cfg)
    np.testing.assert_allclose(float(loss), float(ref), rtol=5e-4, atol=1e-5)


if __name__ == "__main__":
    key = jax.random.PRNGKey(0)
    rho, V = 850.0, 0.01

    base = dict(rho_L_atm=850.0, beta_L_atm=20.0, beta_gain=6.0,
                rho_g_atm=1.2, polytropic_index=1.4,
                p_atm=1.0, p_crit=3.0, p_min=0.1)

    configs = [
        dict(base, bulk_modulus_model='const', air_dissolution_model='on',
             air_fraction=0.005),
        dict(base, bulk_modulus_model='variable', air_dissolution_model='off',
             air_fraction=0.005),
        dict(base, bulk_modulus_model='const', air_dissolution_model='off',
             air_fraction=0.0),
    ]

    keys = jax.random.split(key, len(configs) + 1)
    # small case (seq = 8) across the static branch combinations
    for cfg, k in zip(configs, keys[:-1]):
        _check(cfg, N=8, rho=rho, V=V, key=k)
    # multi-tile case exercising the parallel grid + padding path
    _check(configs[0], N=3000, rho=rho, V=V, key=keys[-1])

    print("KERNEL_OK")
</pallas_src>

<mosaic_0001>
module attributes {stable_mosaic.version = 11 : i64} {
  func.func @_my_loss_kernel(%arg0: i32, %arg1: memref<8x128xf32, #tpu.memory_space<vmem>>, %arg2: memref<8x128xf32, #tpu.memory_space<vmem>>, %arg3: memref<8x128xf32, #tpu.memory_space<vmem>>, %arg4: memref<8x128xf32, #tpu.memory_space<vmem>>, %arg5: memref<8x128xf32, #tpu.memory_space<vmem>>) attributes {dimension_semantics = [#tpu.dimension_semantics<parallel>], iteration_bounds = array<i64: 1>, scalar_prefetch = 0 : i64, scratch_operands = 0 : i64, tpu.core_type = #tpu.core_type<tc>, window_params = [{transform_indices = @transform_0, window_bounds = array<i64: 8, 128>}, {transform_indices = @transform_1, window_bounds = array<i64: 8, 128>}, {transform_indices = @transform_2, window_bounds = array<i64: 8, 128>}, {transform_indices = @transform_3, window_bounds = array<i64: 8, 128>}, {transform_indices = @transform_4, window_bounds = array<i64: 8, 128>}]} {
    %c0 = arith.constant 0 : index
    %c0_0 = arith.constant 0 : index
    %0 = vector.load %arg1[%c0, %c0_0] : memref<8x128xf32, #tpu.memory_space<vmem>>, vector<8x128xf32>
    %cst = arith.constant 1.000000e-01 : f32
    %1 = vector.broadcast %cst : f32 to vector<8x128xf32>
    %2 = arith.maximumf %0, %1 : vector<8x128xf32>
    %cst_1 = arith.constant 1.000000e+00 : f32
    %3 = vector.broadcast %cst_1 : f32 to vector<8x128xf32>
    %4 = arith.subf %2, %3 : vector<8x128xf32>
    %cst_2 = arith.constant 5.000000e-01 : f32
    %5 = vector.broadcast %cst_2 : f32 to vector<8x128xf32>
    %6 = arith.mulf %4, %5 : vector<8x128xf32>
    %7 = arith.mulf %6, %6 : vector<8x128xf32>
    %cst_3 = arith.constant 3.000000e+00 : f32
    %8 = vector.broadcast %cst_3 : f32 to vector<8x128xf32>
    %9 = arith.mulf %8, %7 : vector<8x128xf32>
    %cst_4 = arith.constant 1.000000e+00 : f32
    %10 = vector.broadcast %cst_4 : f32 to vector<8x128xf32>
    %11 = arith.subf %10, %9 : vector<8x128xf32>
    %cst_5 = arith.constant 2.000000e+00 : f32
    %12 = vector.broadcast %cst_5 : f32 to vector<8x128xf32>
    %13 = arith.mulf %12, %7 : vector<8x128xf32>
    %14 = arith.mulf %13, %6 : vector<8x128xf32>
    %15 = arith.addf %11, %14 : vector<8x128xf32>
    %cst_6 = arith.constant 1.000000e+00 : f32
    %16 = vector.broadcast %cst_6 : f32 to vector<8x128xf32>
    %17 = arith.cmpf ole, %2, %16 : vector<8x128xf32>
    %cst_7 = arith.constant 3.000000e+00 : f32
    %18 = vector.broadcast %cst_7 : f32 to vector<8x128xf32>
    %19 = arith.cmpf oge, %2, %18 : vector<8x128xf32>
    %cst_8 = arith.constant 0.000000e+00 : f32
    %20 = vector.broadcast %cst_8 : f32 to vector<8x128xf32>
    %21 = arith.select %19, %20, %15 : vector<8x128xi1>, vector<8x128xf32>
    %cst_9 = arith.constant 1.000000e+00 : f32
    %22 = vector.broadcast %cst_9 : f32 to vector<8x128xf32>
    %23 = arith.select %17, %22, %21 : vector<8x128xi1>, vector<8x128xf32>
    %cst_10 = arith.constant 6.000000e+00 : f32
    %24 = vector.broadcast %cst_10 : f32 to vector<8x128xf32>
    %25 = arith.mulf %24, %4 : vector<8x128xf32>
    %cst_11 = arith.constant 3.000000e+00 : f32
    %26 = vector.broadcast %cst_11 : f32 to vector<8x128xf32>
    %27 = arith.subf %2, %26 : vector<8x128xf32>
    %28 = arith.mulf %25, %27 : vector<8x128xf32>
    %cst_12 = arith.constant 1.250000e-01 : f32
    %29 = vector.broadcast %cst_12 : f32 to vector<8x128xf32>
    %30 = arith.mulf %28, %29 : vector<8x128xf32>
    %cst_13 = arith.constant 1.000000e+00 : f32
    %31 = vector.broadcast %cst_13 : f32 to vector<8x128xf32>
    %32 = arith.cmpf ole, %2, %31 : vector<8x128xf32>
    %cst_14 = arith.constant 3.000000e+00 : f32
    %33 = vector.broadcast %cst_14 : f32 to vector<8x128xf32>
    %34 = arith.cmpf oge, %2, %33 : vector<8x128xf32>
    %35 = arith.ori %32, %34 : vector<8x128xi1>
    %cst_15 = arith.constant 0.000000e+00 : f32
    %36 = vector.broadcast %cst_15 : f32 to vector<8x128xf32>
    %37 = arith.select %35, %36, %30 : vector<8x128xi1>, vector<8x128xf32>
    %38 = math.log %2 : vector<8x128xf32>
    %cst_16 = arith.constant 0.000000e+00 : f32
    %39 = vector.broadcast %cst_16 : f32 to vector<8x128xf32>
    %40 = arith.subf %39, %38 : vector<8x128xf32>
    %cst_17 = arith.constant 0.714285731 : f32
    %41 = vector.broadcast %cst_17 : f32 to vector<8x128xf32>
    %42 = arith.mulf %41, %40 : vector<8x128xf32>
    %43 = math.exp %42 : vector<8x128xf32>
    %cst_18 = arith.constant 0.00502512557 : f32
    %44 = vector.broadcast %cst_18 : f32 to vector<8x128xf32>
    %45 = arith.mulf %44, %43 : vector<8x128xf32>
    %46 = arith.mulf %45, %23 : vector<8x128xf32>
    %47 = tpu.reciprocal %2 {approx = true} : vector<8x128xf32> -> vector<8x128xf32>
    %48 = arith.mulf %23, %47 : vector<8x128xf32>
    %cst_19 = arith.constant 0.714285731 : f32
    %49 = vector.broadcast %cst_19 : f32 to vector<8x128xf32>
    %50 = arith.mulf %48, %49 : vector<8x128xf32>
    %51 = arith.subf %50, %37 : vector<8x128xf32>
    %cst_20 = arith.constant 0.00502512557 : f32
    %52 = vector.broadcast %cst_20 : f32 to vector<8x128xf32>
    %53 = arith.mulf %52, %43 : vector<8x128xf32>
    %54 = arith.mulf %53, %51 : vector<8x128xf32>
    %cst_21 = arith.constant 0.000000e+00 : f32
    %55 = vector.broadcast %cst_21 : f32 to vector<8x128xf32>
    %56 = arith.subf %55, %4 : vector<8x128xf32>
    %cst_22 = arith.constant 5.000000e-02 : f32
    %57 = vector.broadcast %cst_22 : f32 to vector<8x128xf32>
    %58 = arith.mulf %56, %57 : vector<8x128xf32>
    %59 = math.exp %58 : vector<8x128xf32>
    %cst_23 = arith.constant 5.000000e-02 : f32
    %60 = vector.broadcast %cst_23 : f32 to vector<8x128xf32>
    %61 = arith.mulf %59, %60 : vector<8x128xf32>
    %cst_24 = arith.constant 2.000000e+01 : f32
    %62 = vector.broadcast %cst_24 : f32 to vector<8x128xf32>
    %63 = arith.mulf %62, %61 : vector<8x128xf32>
    %64 = arith.addf %63, %46 : vector<8x128xf32>
    %65 = tpu.reciprocal %64 {approx = true} : vector<8x128xf32> -> vector<8x128xf32>
    %66 = arith.addf %61, %54 : vector<8x128xf32>
    %cst_25 = arith.constant 850.006042 : f32
    %67 = vector.broadcast %cst_25 : f32 to vector<8x128xf32>
    %68 = arith.mulf %67, %66 : vector<8x128xf32>
    %69 = arith.mulf %68, %65 : vector<8x128xf32>
    %70 = arith.mulf %69, %65 : vector<8x128xf32>
    %cst_26 = arith.constant 0.00999999977 : f32
    %71 = vector.broadcast %cst_26 : f32 to vector<8x128xf32>
    %72 = arith.mulf %71, %70 : vector<8x128xf32>
    %c0_27 = arith.constant 0 : index
    %c0_28 = arith.constant 0 : index
    %73 = vector.load %arg3[%c0_27, %c0_28] : memref<8x128xf32, #tpu.memory_space<vmem>>, vector<8x128xf32>
    %74 = arith.mulf %72, %73 : vector<8x128xf32>
    %c0_29 = arith.constant 0 : index
    %c0_30 = arith.constant 0 : index
    %75 = vector.load %arg4[%c0_29, %c0_30] : memref<8x128xf32, #tpu.memory_space<vmem>>, vector<8x128xf32>
    %76 = arith.subf %74, %75 : vector<8x128xf32>
    %77 = math.absf %76 : vector<8x128xf32>
    %c0_31 = arith.constant 0 : index
    %c0_32 = arith.constant 0 : index
    %78 = vector.load %arg2[%c0_31, %c0_32] : memref<8x128xf32, #tpu.memory_space<vmem>>, vector<8x128xf32>
    %79 = arith.subf %0, %78 : vector<8x128xf32>
    %80 = math.absf %79 : vector<8x128xf32>
    %cst_33 = arith.constant 1.000000e-03 : f32
    %81 = vector.broadcast %cst_33 : f32 to vector<8x128xf32>
    %82 = arith.mulf %81, %77 : vector<8x128xf32>
    %83 = arith.addf %80, %82 : vector<8x128xf32>
    %c0_34 = arith.constant 0 : index
    %c0_35 = arith.constant 0 : index
    %84 = vector.load %arg5[%c0_34, %c0_35] : memref<8x128xf32, #tpu.memory_space<vmem>>, vector<8x128xf32>
    tpu.vector_store %arg5[%c0_34, %c0_35], %83 {strides = array<i32>} : memref<8x128xf32, #tpu.memory_space<vmem>>, vector<8x128xf32>,
    return
  }
  func.func @transform_0(%arg0: i32) -> (i32, i32) {
    %c0_i32 = arith.constant 0 : i32
    %c0_i32_0 = arith.constant 0 : i32
    return %arg0, %c0_i32 : i32, i32
  }
  func.func @transform_1(%arg0: i32) -> (i32, i32) {
    %c0_i32 = arith.constant 0 : i32
    %c0_i32_0 = arith.constant 0 : i32
    return %arg0, %c0_i32 : i32, i32
  }
  func.func @transform_2(%arg0: i32) -> (i32, i32) {
    %c0_i32 = arith.constant 0 : i32
    %c0_i32_0 = arith.constant 0 : i32
    return %arg0, %c0_i32 : i32, i32
  }
  func.func @transform_3(%arg0: i32) -> (i32, i32) {
    %c0_i32 = arith.constant 0 : i32
    %c0_i32_0 = arith.constant 0 : i32
    return %arg0, %c0_i32 : i32, i32
  }
  func.func @transform_4(%arg0: i32) -> (i32, i32) {
    %c0_i32 = arith.constant 0 : i32
    %c0_i32_0 = arith.constant 0 : i32
    return %arg0, %c0_i32 : i32, i32
  }
}

</mosaic_0001>

<llo_original>
// kernel: tpu_custom_call.1
$region0: #{tpu_custom_call.1}
  #allocation0 [shape = 'u32[]', space=smem, size = 0x4, offset = 0x4, fixed_abs, tag = 'smem constant byte address 0x4 - core index']
  #allocation1 [shape = 'u32[144,128]{1,0:T(1,128)}', space=vmem, size = 0x12000, scoped, tag = 'internal scratch']
  %s0 = inlined_call_operand.hbm [shape: f32[8,128], index: 0, kind: input, shape index: {}]
  %s1 = inlined_call_operand.hbm [shape: f32[8,128], index: 1, kind: input, shape index: {}]
  %s2 = inlined_call_operand.hbm [shape: f32[8,128], index: 2, kind: input, shape index: {}]
  %s3 = inlined_call_operand.vmem [shape: f32[8,128], index: 3, kind: input, shape index: {}]
  %s4 = inlined_call_operand.hbm [shape: f32[8,128], index: 4, kind: output, shape index: {}]
  %s5 = sld [smem:[#allocation0]]
  $region38: #{tpu_custom_call.1} parent=0
    _
  %s7 = ssub.s32 1, %s5
  %s8 = scalar_select 0, %s7, %s5
  $region1: #{tpu_custom_call.1} parent=0
    #allocation2 [shape = 'u8[4096]{0}', space=vmem, size = 0x1000, scoped, tag = 'input window, operand 0, single buffered']
    #allocation3 [shape = 's32[1]{0}', space=sflag, size = 0x4, scoped, tag = 'scoped memory for tpu_custom_call.1']
    #allocation4 [shape = 's32[1]{0}', space=sflag, size = 0x4, scoped, tag = 'scoped memory for tpu_custom_call.1']
    #allocation5 [shape = 'u8[4096]{0}', space=vmem, size = 0x1000, scoped, tag = 'input window, operand 1, single buffered']
    #allocation6 [shape = 's32[1]{0}', space=sflag, size = 0x4, scoped, tag = 'scoped memory for tpu_custom_call.1']
    #allocation7 [shape = 'u8[4096]{0}', space=vmem, size = 0x1000, scoped, tag = 'input window, operand 2, single buffered']
    #allocation8 [shape = 'u8[4096]{0}', space=vmem, size = 0x1000, scoped, tag = 'output window, operand 0, single buffered']
    %9 = vsyncpa [#allocation3], 0
    %10 = vsyncpa [#allocation6], 0
    %11 = vsyncpa [#allocation4], 0
    // Predicated region
    $region2: #{tpu_custom_call.1} parent=1 // pred_check
      _
    $region3: #{tpu_custom_call.1} parent=1 // pred_check_branch
      %13 = sbr.rel (0) target = $region5
    $region4: #{tpu_custom_call.1} parent=1 // pred_region
      %s15 = ssub.s32 128, 128
      %16 = vsyncadd [#allocation3], %s15
      %s18 = sshll.u32 [#allocation2], 4
      %s19 = int_to_ptr.vmem [resolvable:$true] %s18
      %21 = dma.hbm_to_vmem [thread:$0]  %s0, 128, %s19, [#allocation3]
    $region5: #{tpu_custom_call.1} parent=1 // pred_fallthru
      _
    // Predicated region
    $region6: #{tpu_custom_call.1} parent=1 // pred_check
      _
    $region7: #{tpu_custom_call.1} parent=1 // pred_check_branch
      %23 = sbr.rel (0) target = $region9
    $region8: #{tpu_custom_call.1} parent=1 // pred_region
      %s25 = ssub.s32 128, 128
      %26 = vsyncadd [#allocation6], %s25
      %s28 = sshll.u32 [#allocation5], 4
      %s29 = int_to_ptr.vmem [resolvable:$true] %s28
      %31 = dma.hbm_to_vmem [thread:$0]  %s1, 128, %s29, [#allocation6]
    $region9: #{tpu_custom_call.1} parent=1 // pred_fallthru
      _
    // Predicated region
    $region10: #{tpu_custom_call.1} parent=1 // pred_check
      _
    $region11: #{tpu_custom_call.1} parent=1 // pred_check_branch
      %33 = sbr.rel (0) target = $region13
    $region12: #{tpu_custom_call.1} parent=1 // pred_region
      %s35 = ssub.s32 128, 128
      %36 = vsyncadd [#allocation6], %s35
      %s38 = sshll.u32 [#allocation7], 4
      %s39 = int_to_ptr.vmem [resolvable:$true] %s38
      %41 = dma.hbm_to_vmem [thread:$0]  %s2, 128, %s39, [#allocation6]
    $region13: #{tpu_custom_call.1} parent=1 // pred_fallthru
      _
    // Predicated region
    $region14: #{tpu_custom_call.1} parent=1 // pred_check
      _
    $region15: #{tpu_custom_call.1} parent=1 // pred_check_branch
      %43 = sbr.rel (0) target = $region17
    $region16: #{tpu_custom_call.1} parent=1 // pred_region
      _
    $region17: #{tpu_custom_call.1} parent=1 // pred_fallthru
      _
    // Predicated region
    $region18: #{tpu_custom_call.1} parent=1 // pred_check
      _
    $region19: #{tpu_custom_call.1} parent=1 // pred_check_branch
      %45 = sbr.rel (0) target = $region21
    $region20: #{tpu_custom_call.1} parent=1 // pred_region
      %46 = dma.done [#allocation3], 128
    $region21: #{tpu_custom_call.1} parent=1 // pred_fallthru
      _
    // Predicated region
    $region22: #{tpu_custom_call.1} parent=1 // pred_check
      _
    $region23: #{tpu_custom_call.1} parent=1 // pred_check_branch
      %48 = sbr.rel (0) target = $region25
    $region24: #{tpu_custom_call.1} parent=1 // pred_region
      %49 = dma.done [#allocation6], 128
    $region25: #{tpu_custom_call.1} parent=1 // pred_fallthru
      _
    // Predicated region
    $region26: #{tpu_custom_call.1} parent=1 // pred_check
      _
    $region27: #{tpu_custom_call.1} parent=1 // pred_check_branch
      %51 = sbr.rel (0) target = $region29
    $region28: #{tpu_custom_call.1} parent=1 // pred_region
      %52 = dma.done [#allocation6], 128
    $region29: #{tpu_custom_call.1} parent=1 // pred_fallthru
      _
    %v53 = vld [vmem:[#allocation2] sm:$0xff]
    %v54 = vmax.f32 %v53, 0.1
    %v55 = vsub.f32 %v54, 1.0
    %v56 = vmul.f32 %v55, 0.5
    %v57 = vmul.f32 %v56, %v56
    %v58 = vmul.f32 %v57, 3.0
    %v59 = vsub.f32 1.0, %v58
    %v60 = vmul.f32 %v57, 2.0
    %v61 = vmul.f32 %v60, %v56
    %v62 = vadd.f32 %v59, %v61
    %vm63 = vcmp.le.f32.partialorder %v54, 1.0
    %vm64 = vcmp.ge.f32.partialorder %v54, 3.0
    %v65 = vsel %vm64, 0.0, %v62
    %v66 = vsel %vm63, 1.0, %v65
    %v67 = vmul.f32 %v55, 6.0
    %v68 = vsub.f32 %v54, 3.0
    %v69 = vmul.f32 %v67, %v68
    %v70 = vmul.f32 %v69, 0.125
    %vm71 = vmor %vm63, %vm64
    %v72 = vsel %vm71, 0.0, %v70
    %v73 = vlog2.pop %v54
    %v74 = vmul.f32 %v73, 0.6931472
    %v75 = vsub.f32 0.0, %v74
    %v76 = vmul.f32 %v75, 0.71428573
    %v77 = vmul.f32 %v76, 1.442695
    %v78 = vpow.pop %v77
    %v79 = vmul.f32 %v78, 0.0050251256
    %v80 = vmul.f32 %v79, %v66
    %v81 = vrcp.pop %v54
    %v82 = vmul.f32 %v66, %v81
    %v83 = vmul.f32 %v82, 0.71428573
    %v84 = vsub.f32 %v83, %v72
    %v85 = vmul.f32 %v79, %v84
    %v86 = vsub.f32 0.0, %v55
    %v87 = vmul.f32 %v86, 0.05
    %v88 = vmul.f32 %v87, 1.442695
    %v89 = vpow.pop %v88
    %v90 = vmul.f32 %v89, 0.05
    %v91 = vmul.f32 %v90, 20.0
    %v92 = vadd.f32 %v91, %v80
    %v93 = vrcp.pop %v92
    %v94 = vadd.f32 %v90, %v85
    %v95 = vmul.f32 %v94, 850.00604
    %v96 = vmul.f32 %v95, %v93
    %v97 = vmul.f32 %v96, %v93
    %v98 = vmul.f32 %v97, 0.01
    %v99 = vld [vmem:[#allocation7] sm:$0xff]
    %v100 = vmul.f32 %v98, %v99
    %v101 = vld [vmem:[%s3] sm:$0xff]
    %v102 = vsub.f32 %v100, %v101
    %v103 = vand.u32 2147483647, %v102
    %v104 = vld [vmem:[#allocation5] sm:$0xff]
    %v105 = vsub.f32 %v53, %v104
    %v106 = vand.u32 2147483647, %v105
    %v107 = vmul.f32 %v103, 0.001
    %v108 = vadd.f32 %v106, %v107
    %109 = vst [vmem:[#allocation8] sm:$0xff] %v108
    // Predicated region
    $region30: #{tpu_custom_call.1} parent=1 // pred_check
      _
    $region31: #{tpu_custom_call.1} parent=1 // pred_check_branch
      %111 = sbr.rel (0) target = $region33
    $region32: #{tpu_custom_call.1} parent=1 // pred_region
      %s113 = ssub.s32 128, 128
      %114 = vsyncadd [#allocation4], %s113
      %s116 = sshll.u32 [#allocation8], 4
      %s117 = int_to_ptr.vmem [resolvable:$true] %s116
      %119 = dma.vmem_to_hbm [thread:$0]  %s117, 128, %s4, [#allocation4]
    $region33: #{tpu_custom_call.1} parent=1 // pred_fallthru
      _
    // Predicated region
    $region34: #{tpu_custom_call.1} parent=1 // pred_check
      _
    $region35: #{tpu_custom_call.1} parent=1 // pred_check_branch
      %121 = sbr.rel (0) target = $region37
    $region36: #{tpu_custom_call.1} parent=1 // pred_region
      %122 = dma.done [#allocation4], 128
    $region37: #{tpu_custom_call.1} parent=1 // pred_fallthru
      _
    %123 = vsyncpa [#allocation3], 1
    %124 = vsyncpa [#allocation6], 1
    %125 = vsyncpa [#allocation4], 1

</llo_original>
